<compile_context>
chip_gen: v5e
topology: v5e:2x2
jax: 0.10.0
libtpu: 0.0.40
codegen_flags: <defaults>
</compile_context>

<pallas_src>
import jax
import jax.numpy as jnp
from jax.experimental import pallas as pl
from jax.experimental.pallas import tpu as pltpu


def head_kernel_fused(x_ref, w_ref, b_ref, feat_ref, logits_ref):
    # x_ref/feat_ref: (tn, C*H*W)   lane-dense relu + writeback
    # w_ref:          (C*H*W, n_cls_out)  classifier weight with 1/HW pooling folded in
    # b_ref:          (1, n_cls_out)
    # logits_ref:     (tn, n_cls_out)
    x_relu = jnp.maximum(x_ref[...], 0.0)          # F.relu (inplace via aliasing)
    feat_ref[...] = x_relu
    logits_ref[...] = (
        jnp.dot(x_relu, w_ref[...], preferred_element_type=jnp.float32) + b_ref[...]
    ).astype(logits_ref.dtype)


def head_kernel_pooled(x_ref, w_ref, b_ref, feat_ref, logits_ref):
    # Fallback for very large C*H*W*n_classes where the expanded weight would
    # not fit VMEM.  x_ref/feat_ref: (tn, C, HW); w_ref: (C, n_cls_out).
    x_relu = jnp.maximum(x_ref[...], 0.0)
    feat_ref[...] = x_relu
    inv_hw = 1.0 / x_ref.shape[-1]                  # constant multiply, not a div
    pooled = jnp.sum(x_relu, axis=-1) * inv_hw      # adaptive_avg_pool2d(1,1)+flatten
    logits_ref[...] = (
        jnp.dot(pooled, w_ref[...], preferred_element_type=jnp.float32) + b_ref[...]
    ).astype(logits_ref.dtype)


def model_head_forward(
    feature_map_nchw,
    weight,
    bias,
    *,
    batch_tile_bytes=4 * 1024 * 1024,          # per-tile input bytes target
    expand_weight_budget_bytes=8 * 1024 * 1024,  # max VMEM for the HW-expanded weight
):
    """feature_map_nchw: (N, C, H, W) float32  (output of self.features)
       weight: (n_classes, C)  torch nn.Linear layout
       bias:   (n_classes,)
       returns (features_after_inplace_relu (N, C, H, W), ce_output (N, n_classes))."""
    N, C, H, W = feature_map_nchw.shape
    HW = H * W
    K = C * HW
    n_classes = weight.shape[0]
    f32 = jnp.float32

    # --- choose the classifier layout -------------------------------------
    pad128 = ((n_classes + 127) // 128) * 128
    if K * pad128 * 4 <= expand_weight_budget_bytes:
        use_expanded, n_cls_out = True, pad128          # lane-dense logits too
    elif K * n_classes * 4 <= expand_weight_budget_bytes:
        use_expanded, n_cls_out = True, n_classes       # expanded, unpadded classes
    else:
        use_expanded, n_cls_out = False, pad128         # pooled fallback

    # --- batch tiling: (x tile + feat tile), double-buffered, stays small ---
    bytes_per_row = K * 4
    max_rows = max(1, batch_tile_bytes // bytes_per_row)
    if max_rows >= N:
        tn = N
    else:
        tn = min(N, max(8, (max_rows // 8) * 8))        # keep sublane dim aligned
    grid = (pl.cdiv(N, tn),)

    w_t = weight.astype(f32).T                          # (C, n_classes)
    b_pad = jnp.zeros((1, n_cls_out), f32).at[0, :n_classes].set(bias.astype(f32))

    if use_expanded:
        # Fold the average pool into the matmul:
        #   logits[n, j] = sum_k relu(x)[n, k] * w_exp[k, j] + b[j]
        #   w_exp[c*HW + hw, j] = weight[j, c] / HW
        w_exp = jnp.repeat(w_t * (1.0 / HW), HW, axis=0)      # (K, n_classes)
        if n_cls_out != n_classes:
            w_exp = jnp.pad(w_exp, ((0, 0), (0, n_cls_out - n_classes)))
        x = feature_map_nchw.reshape(N, K)
        kernel = head_kernel_fused
        in_arrays = (x, w_exp, b_pad)
        in_specs = [
            pl.BlockSpec((tn, K), lambda n: (n, 0)),
            pl.BlockSpec((K, n_cls_out), lambda n: (0, 0)),   # resident (const index)
            pl.BlockSpec((1, n_cls_out), lambda n: (0, 0)),
        ]
        feat_shape = (N, K)
        feat_spec = pl.BlockSpec((tn, K), lambda n: (n, 0))
        weight_vmem = K * n_cls_out * 4
    else:
        # TODO(synk): for extreme C*H*W*n_classes the next step would be to tile
        # the C reduction with a logits accumulator (reduction axis last, "arbitrary").
        if n_cls_out != n_classes:
            w_t = jnp.pad(w_t, ((0, 0), (0, n_cls_out - n_classes)))
        x = feature_map_nchw.reshape(N, C, HW)
        kernel = head_kernel_pooled
        in_arrays = (x, w_t, b_pad)
        in_specs = [
            pl.BlockSpec((tn, C, HW), lambda n: (n, 0, 0)),
            pl.BlockSpec((C, n_cls_out), lambda n: (0, 0)),
            pl.BlockSpec((1, n_cls_out), lambda n: (0, 0)),
        ]
        feat_shape = (N, C, HW)
        feat_spec = pl.BlockSpec((tn, C, HW), lambda n: (n, 0, 0))
        weight_vmem = C * n_cls_out * 4

    logits_spec = pl.BlockSpec((tn, n_cls_out), lambda n: (n, 0))

    # Explicit scoped-VMEM limit sized for this tiling (v7x has only 64 MiB).
    est = 2 * (2 * tn * K * 4 + weight_vmem + n_cls_out * 4 + tn * n_cls_out * 4)
    vmem_limit = int(min(max(est * 3 // 2 + (2 << 20), 16 * 1024 * 1024),
                         48 * 1024 * 1024))

    feat, logits = pl.pallas_call(
        kernel,
        out_shape=(
            jax.ShapeDtypeStruct(feat_shape, feature_map_nchw.dtype),
            jax.ShapeDtypeStruct((N, n_cls_out), f32),
        ),
        grid_spec=pltpu.PrefetchScalarGridSpec(
            num_scalar_prefetch=0,
            grid=grid,
            in_specs=in_specs,
            out_specs=(feat_spec, logits_spec),
        ),
        # relu is "inplace" in the torch model: relu'd feat reuses x's buffer.
        input_output_aliases={0: 0},
        compiler_params=pltpu.CompilerParams(
            dimension_semantics=("parallel",),   # shard batch tiles across TCs (v7x)
            vmem_limit_bytes=vmem_limit,
        ),
    )(*in_arrays)

    return feat.reshape(N, C, H, W), logits[:, :n_classes]


if __name__ == "__main__":
    key = jax.random.PRNGKey(0)

    def run_case(idx, N, C, H, W, n_classes, **kw):
        k_x, k_w, k_b = jax.random.split(jax.random.fold_in(key, idx), 3)
        feature_map = jax.random.normal(k_x, (N, C, H, W), dtype=jnp.float32)
        # Deterministic nn.Linear-style init: U(-1/sqrt(in), 1/sqrt(in)).
        bound = 1.0 / (C ** 0.5)
        weight = jax.random.uniform(k_w, (n_classes, C), jnp.float32, -bound, bound)
        bias = jax.random.uniform(k_b, (n_classes,), jnp.float32, -bound, bound)

        feat_out, ce_out = model_head_forward(feature_map, weight, bias, **kw)
        jax.block_until_ready((feat_out, ce_out))

        # Reference in plain JAX (matches the torch forward semantics).
        ref_feat = jnp.maximum(feature_map, 0.0)
        ref_pool = jnp.mean(ref_feat.reshape(N, C, -1), axis=-1)
        ref_logits = ref_pool @ weight.T + bias
        assert feat_out.shape == feature_map.shape
        assert ce_out.shape == (N, n_classes)
        assert jnp.allclose(feat_out, ref_feat, atol=1e-5, rtol=1e-5)
        assert jnp.allclose(ce_out, ref_logits, atol=1e-4, rtol=1e-4)

    # 1) Fused path (pool folded into matmul), single batch tile.
    run_case(0, N=4, C=64, H=4, W=4, n_classes=10)
    # 2) Fused path with a multi-tile batch grid and a partial last tile.
    run_case(1, N=12, C=64, H=4, W=4, n_classes=10, batch_tile_bytes=32 * 1024)
    # 3) Pooled fallback path (forced by a zero expansion budget).
    run_case(2, N=4, C=64, H=4, W=4, n_classes=10, expand_weight_budget_bytes=0)

    print("KERNEL_OK")
</pallas_src>

<mosaic_0001>
module attributes {stable_mosaic.version = 11 : i64} {
  func.func @head_kernel_fused(%arg0: i32, %arg1: memref<4x1024xf32, #tpu.memory_space<vmem>>, %arg2: memref<1024x128xf32, #tpu.memory_space<vmem>>, %arg3: memref<1x128xf32, #tpu.memory_space<vmem>>, %arg4: memref<4x1024xf32, #tpu.memory_space<vmem>>, %arg5: memref<4x128xf32, #tpu.memory_space<vmem>>) attributes {dimension_semantics = [#tpu.dimension_semantics<parallel>], iteration_bounds = array<i64: 1>, scalar_prefetch = 0 : i64, scratch_operands = 0 : i64, tpu.core_type = #tpu.core_type<tc>, window_params = [{transform_indices = @transform_0, window_bounds = array<i64: 4, 1024>}, {pipeline_mode = #tpu.pipeline_mode<synchronous>, transform_indices = @transform_1, window_bounds = array<i64: 1024, 128>}, {pipeline_mode = #tpu.pipeline_mode<synchronous>, transform_indices = @transform_2, window_bounds = array<i64: 1, 128>}, {transform_indices = @transform_3, window_bounds = array<i64: 4, 1024>}, {transform_indices = @transform_4, window_bounds = array<i64: 4, 128>}]} {
    %c0 = arith.constant 0 : index
    %c0_0 = arith.constant 0 : index
    %0 = vector.load %arg1[%c0, %c0_0] : memref<4x1024xf32, #tpu.memory_space<vmem>>, vector<4x1024xf32>
    %cst = arith.constant 0.000000e+00 : f32
    %1 = vector.broadcast %cst : f32 to vector<4x1024xf32>
    %2 = arith.maximumf %0, %1 : vector<4x1024xf32>
    %c0_1 = arith.constant 0 : index
    %c0_2 = arith.constant 0 : index
    %3 = vector.load %arg4[%c0_1, %c0_2] : memref<4x1024xf32, #tpu.memory_space<vmem>>, vector<4x1024xf32>
    tpu.vector_store %arg4[%c0_1, %c0_2], %2 {strides = array<i32>} : memref<4x1024xf32, #tpu.memory_space<vmem>>, vector<4x1024xf32>,
    %c0_3 = arith.constant 0 : index
    %c0_4 = arith.constant 0 : index
    %4 = vector.load %arg2[%c0_3, %c0_4] : memref<1024x128xf32, #tpu.memory_space<vmem>>, vector<1024x128xf32>
    %cst_5 = arith.constant dense<0.000000e+00> : vector<4x128xf32>
    %5 = tpu.matmul %2, %4, %cst_5 {dimension_numbers = #tpu.dot_dimension_numbers<[1], [0], [0], [1], [0, 0, 1, 1], [], []>} : vector<4x1024xf32>, vector<1024x128xf32>, vector<4x128xf32> -> vector<4x128xf32>
    %c0_6 = arith.constant 0 : index
    %c0_7 = arith.constant 0 : index
    %6 = vector.load %arg3[%c0_6, %c0_7] : memref<1x128xf32, #tpu.memory_space<vmem>>, vector<1x128xf32>
    %7 = vector.broadcast %6 : vector<1x128xf32> to vector<4x128xf32>
    %8 = arith.addf %5, %7 : vector<4x128xf32>
    %c0_8 = arith.constant 0 : index
    %c0_9 = arith.constant 0 : index
    %9 = vector.load %arg5[%c0_8, %c0_9] : memref<4x128xf32, #tpu.memory_space<vmem>>, vector<4x128xf32>
    tpu.vector_store %arg5[%c0_8, %c0_9], %8 {strides = array<i32>} : memref<4x128xf32, #tpu.memory_space<vmem>>, vector<4x128xf32>,
    return
  }
  func.func @transform_0(%arg0: i32) -> (i32, i32) {
    %c0_i32 = arith.constant 0 : i32
    %c0_i32_0 = arith.constant 0 : i32
    return %arg0, %c0_i32 : i32, i32
  }
  func.func @transform_1(%arg0: i32) -> (i32, i32) {
    %c0_i32 = arith.constant 0 : i32
    %c0_i32_0 = arith.constant 0 : i32
    %c0_i32_1 = arith.constant 0 : i32
    return %c0_i32, %c0_i32_0 : i32, i32
  }
  func.func @transform_2(%arg0: i32) -> (i32, i32) {
    %c0_i32 = arith.constant 0 : i32
    %c0_i32_0 = arith.constant 0 : i32
    %c0_i32_1 = arith.constant 0 : i32
    return %c0_i32, %c0_i32_0 : i32, i32
  }
  func.func @transform_3(%arg0: i32) -> (i32, i32) {
    %c0_i32 = arith.constant 0 : i32
    %c0_i32_0 = arith.constant 0 : i32
    return %arg0, %c0_i32 : i32, i32
  }
  func.func @transform_4(%arg0: i32) -> (i32, i32) {
    %c0_i32 = arith.constant 0 : i32
    %c0_i32_0 = arith.constant 0 : i32
    return %arg0, %c0_i32 : i32, i32
  }
}

</mosaic_0001>

<llo_original>
// kernel: tpu_custom_call.1
$region0: #{tpu_custom_call.1}
  #allocation0 [shape = 'u32[]', space=smem, size = 0x4, offset = 0x4, fixed_abs, tag = 'smem constant byte address 0x4 - core index']
  #allocation1 [shape = 'u32[72,128]{1,0:T(1,128)}', space=vmem, size = 0x9000, scoped, tag = 'internal scratch']
  %s0 = inlined_call_operand.hbm [shape: f32[4,1024], index: 0, kind: input, shape index: {}, may-alias: {0,3}]
  %s1 = inlined_call_operand.hbm [shape: f32[1024,128], index: 1, kind: input, shape index: {}]
  %s2 = inlined_call_operand.vmem [shape: f32[1,128], index: 2, kind: input, shape index: {}]
  %s3 = inlined_call_operand.hbm [shape: f32[4,1024], index: 3, kind: output, shape index: {0}, may-alias: {0,3}]
  %s4 = inlined_call_operand.hbm [shape: f32[4,128], index: 4, kind: output, shape index: {1}]
  %5 = xla_tuple %s3, %s4
  %s6 = sld [smem:[#allocation0]]
  $region38: #{tpu_custom_call.1} parent=0
    _
  %s8 = ssub.s32 1, %s6
  %s9 = scalar_select 0, %s8, %s6
  $region1: #{tpu_custom_call.1} parent=0
    #allocation2 [shape = 'u8[16384]{0}', space=vmem, size = 0x4000, scoped, tag = 'input window, operand 0, single buffered']
    #allocation3 [shape = 's32[1]{0}', space=sflag, size = 0x4, scoped, tag = 'scoped memory for tpu_custom_call.1']
    #allocation4 [shape = 's32[1]{0}', space=sflag, size = 0x4, scoped, tag = 'scoped memory for tpu_custom_call.1']
    #allocation5 [shape = 'u8[524288]{0}', space=vmem, size = 0x80000, scoped, tag = 'input window, operand 1, single buffered']
    #allocation6 [shape = 's32[1]{0}', space=sflag, size = 0x4, scoped, tag = 'scoped memory for tpu_custom_call.1']
    #allocation7 [shape = 'u8[16384]{0}', space=vmem, size = 0x4000, scoped, tag = 'output window, operand 0, single buffered']
    #allocation8 [shape = 'u8[2048]{0}', space=vmem, size = 0x800, scoped, tag = 'output window, operand 1, single buffered']
    #allocation9 [shape = 's32[1]{0}', space=sflag, size = 0x4, scoped, tag = 'scoped memory for tpu_custom_call.1']
    %10 = vsyncpa [#allocation3], 0
    %11 = vsyncpa [#allocation6], 0
    %12 = vsyncpa [#allocation4], 0
    %13 = vsyncpa [#allocation9], 0
    // Predicated region
    $region2: #{tpu_custom_call.1} parent=1 // pred_check
      _
    $region3: #{tpu_custom_call.1} parent=1 // pred_check_branch
      %15 = sbr.rel (0) target = $region5
    $region4: #{tpu_custom_call.1} parent=1 // pred_region
      %17 = vsyncadd [#allocation3], 0
      %s19 = sshll.u32 %s0, 4
      %s20 = int_to_ptr.hbm [resolvable:$true] %s19
      %s21 = sshll.u32 [#allocation2], 4
      %s22 = int_to_ptr.vmem [resolvable:$true] %s21
      %24 = dma.hbm_to_vmem [thread:$0]  %s20, 512, %s22, [#allocation3]
    $region5: #{tpu_custom_call.1} parent=1 // pred_fallthru
      _
    // Predicated region
    $region6: #{tpu_custom_call.1} parent=1 // pred_check
      _
    $region7: #{tpu_custom_call.1} parent=1 // pred_check_branch
      %26 = sbr.rel (0) target = $region9
    $region8: #{tpu_custom_call.1} parent=1 // pred_region
      %28 = vsyncadd [#allocation6], 0
      %s29 = sshll.u32 %s1, 4
      %s30 = int_to_ptr.hbm [resolvable:$true] %s29
      %s31 = sshll.u32 [#allocation5], 4
      %s32 = int_to_ptr.vmem [resolvable:$true] %s31
      %37 = dma.hbm_to_vmem [thread:$0]  %s30, 16384, %s32, [#allocation6], 128, 128, 8
    $region9: #{tpu_custom_call.1} parent=1 // pred_fallthru
      _
    // Predicated region
    $region10: #{tpu_custom_call.1} parent=1 // pred_check
      _
    $region11: #{tpu_custom_call.1} parent=1 // pred_check_branch
      %39 = sbr.rel (0) target = $region13
    $region12: #{tpu_custom_call.1} parent=1 // pred_region
      _
    $region13: #{tpu_custom_call.1} parent=1 // pred_fallthru
      _
    // Predicated region
    $region14: #{tpu_custom_call.1} parent=1 // pred_check
      _
    $region15: #{tpu_custom_call.1} parent=1 // pred_check_branch
      %41 = sbr.rel (0) target = $region17
    $region16: #{tpu_custom_call.1} parent=1 // pred_region
      %43 = dma.done [#allocation3], 512
    $region17: #{tpu_custom_call.1} parent=1 // pred_fallthru
      _
    // Predicated region
    $region18: #{tpu_custom_call.1} parent=1 // pred_check
      _
    $region19: #{tpu_custom_call.1} parent=1 // pred_check_branch
      %45 = sbr.rel (0) target = $region21
    $region20: #{tpu_custom_call.1} parent=1 // pred_region
      %47 = dma.done [#allocation6], 16384
    $region21: #{tpu_custom_call.1} parent=1 // pred_fallthru
      _
    %v48 = vld [vmem:[#allocation2] sm:$0xff]
    %v49 = vld [vmem:[#allocation2 + $0x8] sm:$0xff]
    %v50 = vld [vmem:[#allocation2 + $0x10] sm:$0xff]
    %v51 = vld [vmem:[#allocation2 + $0x18] sm:$0xff]
    %v52 = vmax.f32 %v48, 0.0
    %v53 = vmax.f32 %v49, 0.0
    %v54 = vmax.f32 %v50, 0.0
    %v55 = vmax.f32 %v51, 0.0
    %56 = vst [vmem:[#allocation7] sm:$0xff] %v52
    %57 = vst [vmem:[#allocation7 + $0x8] sm:$0xff] %v53
    %58 = vst [vmem:[#allocation7 + $0x10] sm:$0xff] %v54
    %59 = vst [vmem:[#allocation7 + $0x18] sm:$0xff] %v55
    %v60 = vld [vmem:[#allocation5] sm:$0xff]
    %v61 = vld [vmem:[#allocation5 + $0x8] sm:$0xff]
    %v62 = vld [vmem:[#allocation5 + $0x10] sm:$0xff]
    %v63 = vld [vmem:[#allocation5 + $0x18] sm:$0xff]
    %v64 = vld [vmem:[#allocation5 + $0x20] sm:$0xff]
    %v65 = vld [vmem:[#allocation5 + $0x28] sm:$0xff]
    %v66 = vld [vmem:[#allocation5 + $0x30] sm:$0xff]
    %v67 = vld [vmem:[#allocation5 + $0x38] sm:$0xff]
    %v68 = vld [vmem:[#allocation5 + $0x40] sm:$0xff]
    %v69 = vld [vmem:[#allocation5 + $0x48] sm:$0xff]
    %v70 = vld [vmem:[#allocation5 + $0x50] sm:$0xff]
    %v71 = vld [vmem:[#allocation5 + $0x58] sm:$0xff]
    %v72 = vld [vmem:[#allocation5 + $0x60] sm:$0xff]
    %v73 = vld [vmem:[#allocation5 + $0x68] sm:$0xff]
    %v74 = vld [vmem:[#allocation5 + $0x70] sm:$0xff]
    %v75 = vld [vmem:[#allocation5 + $0x78] sm:$0xff]
    %v76 = vld [vmem:[#allocation5 + $0x80] sm:$0xff]
    %v77 = vld [vmem:[#allocation5 + $0x88] sm:$0xff]
    %v78 = vld [vmem:[#allocation5 + $0x90] sm:$0xff]
    %v79 = vld [vmem:[#allocation5 + $0x98] sm:$0xff]
    %v80 = vld [vmem:[#allocation5 + $0xa0] sm:$0xff]
    %v81 = vld [vmem:[#allocation5 + $0xa8] sm:$0xff]
    %v82 = vld [vmem:[#allocation5 + $0xb0] sm:$0xff]
    %v83 = vld [vmem:[#allocation5 + $0xb8] sm:$0xff]
    %v84 = vld [vmem:[#allocation5 + $0xc0] sm:$0xff]
    %v85 = vld [vmem:[#allocation5 + $0xc8] sm:$0xff]
    %v86 = vld [vmem:[#allocation5 + $0xd0] sm:$0xff]
    %v87 = vld [vmem:[#allocation5 + $0xd8] sm:$0xff]
    %v88 = vld [vmem:[#allocation5 + $0xe0] sm:$0xff]
    %v89 = vld [vmem:[#allocation5 + $0xe8] sm:$0xff]
    %v90 = vld [vmem:[#allocation5 + $0xf0] sm:$0xff]
    %v91 = vld [vmem:[#allocation5 + $0xf8] sm:$0xff]
    %v92 = vld [vmem:[#allocation5 + $0x100] sm:$0xff]
    %v93 = vld [vmem:[#allocation5 + $0x108] sm:$0xff]
    %v94 = vld [vmem:[#allocation5 + $0x110] sm:$0xff]
    %v95 = vld [vmem:[#allocation5 + $0x118] sm:$0xff]
    %v96 = vld [vmem:[#allocation5 + $0x120] sm:$0xff]
    %v97 = vld [vmem:[#allocation5 + $0x128] sm:$0xff]
    %v98 = vld [vmem:[#allocation5 + $0x130] sm:$0xff]
    %v99 = vld [vmem:[#allocation5 + $0x138] sm:$0xff]
    %v100 = vld [vmem:[#allocation5 + $0x140] sm:$0xff]
    %v101 = vld [vmem:[#allocation5 + $0x148] sm:$0xff]
    %v102 = vld [vmem:[#allocation5 + $0x150] sm:$0xff]
    %v103 = vld [vmem:[#allocation5 + $0x158] sm:$0xff]
    %v104 = vld [vmem:[#allocation5 + $0x160] sm:$0xff]
    %v105 = vld [vmem:[#allocation5 + $0x168] sm:$0xff]
    %v106 = vld [vmem:[#allocation5 + $0x170] sm:$0xff]
    %v107 = vld [vmem:[#allocation5 + $0x178] sm:$0xff]
    %v108 = vld [vmem:[#allocation5 + $0x180] sm:$0xff]
    %v109 = vld [vmem:[#allocation5 + $0x188] sm:$0xff]
    %v110 = vld [vmem:[#allocation5 + $0x190] sm:$0xff]
    %v111 = vld [vmem:[#allocation5 + $0x198] sm:$0xff]
    %v112 = vld [vmem:[#allocation5 + $0x1a0] sm:$0xff]
    %v113 = vld [vmem:[#allocation5 + $0x1a8] sm:$0xff]
    %v114 = vld [vmem:[#allocation5 + $0x1b0] sm:$0xff]
    %v115 = vld [vmem:[#allocation5 + $0x1b8] sm:$0xff]
    %v116 = vld [vmem:[#allocation5 + $0x1c0] sm:$0xff]
    %v117 = vld [vmem:[#allocation5 + $0x1c8] sm:$0xff]
    %v118 = vld [vmem:[#allocation5 + $0x1d0] sm:$0xff]
    %v119 = vld [vmem:[#allocation5 + $0x1d8] sm:$0xff]
    %v120 = vld [vmem:[#allocation5 + $0x1e0] sm:$0xff]
    %v121 = vld [vmem:[#allocation5 + $0x1e8] sm:$0xff]
    %v122 = vld [vmem:[#allocation5 + $0x1f0] sm:$0xff]
    %v123 = vld [vmem:[#allocation5 + $0x1f8] sm:$0xff]
    %v124 = vld [vmem:[#allocation5 + $0x200] sm:$0xff]
    %v125 = vld [vmem:[#allocation5 + $0x208] sm:$0xff]
    %v126 = vld [vmem:[#allocation5 + $0x210] sm:$0xff]
    %v127 = vld [vmem:[#allocation5 + $0x218] sm:$0xff]
    %v128 = vld [vmem:[#allocation5 + $0x220] sm:$0xff]
    %v129 = vld [vmem:[#allocation5 + $0x228] sm:$0xff]
    %v130 = vld [vmem:[#allocation5 + $0x230] sm:$0xff]
    %v131 = vld [vmem:[#allocation5 + $0x238] sm:$0xff]
    %v132 = vld [vmem:[#allocation5 + $0x240] sm:$0xff]
    %v133 = vld [vmem:[#allocation5 + $0x248] sm:$0xff]
    %v134 = vld [vmem:[#allocation5 + $0x250] sm:$0xff]
    %v135 = vld [vmem:[#allocation5 + $0x258] sm:$0xff]
    %v136 = vld [vmem:[#allocation5 + $0x260] sm:$0xff]
    %v137 = vld [vmem:[#allocation5 + $0x268] sm:$0xff]
    %v138 = vld [vmem:[#allocation5 + $0x270] sm:$0xff]
    %v139 = vld [vmem:[#allocation5 + $0x278] sm:$0xff]
    %v140 = vld [vmem:[#allocation5 + $0x280] sm:$0xff]
    %v141 = vld [vmem:[#allocation5 + $0x288] sm:$0xff]
    %v142 = vld [vmem:[#allocation5 + $0x290] sm:$0xff]
    %v143 = vld [vmem:[#allocation5 + $0x298] sm:$0xff]
    %v144 = vld [vmem:[#allocation5 + $0x2a0] sm:$0xff]
    %v145 = vld [vmem:[#allocation5 + $0x2a8] sm:$0xff]
    %v146 = vld [vmem:[#allocation5 + $0x2b0] sm:$0xff]
    %v147 = vld [vmem:[#allocation5 + $0x2b8] sm:$0xff]
    %v148 = vld [vmem:[#allocation5 + $0x2c0] sm:$0xff]
    %v149 = vld [vmem:[#allocation5 + $0x2c8] sm:$0xff]
    %v150 = vld [vmem:[#allocation5 + $0x2d0] sm:$0xff]
    %v151 = vld [vmem:[#allocation5 + $0x2d8] sm:$0xff]
    %v152 = vld [vmem:[#allocation5 + $0x2e0] sm:$0xff]
    %v153 = vld [vmem:[#allocation5 + $0x2e8] sm:$0xff]
    %v154 = vld [vmem:[#allocation5 + $0x2f0] sm:$0xff]
    %v155 = vld [vmem:[#allocation5 + $0x2f8] sm:$0xff]
    %v156 = vld [vmem:[#allocation5 + $0x300] sm:$0xff]
    %v157 = vld [vmem:[#allocation5 + $0x308] sm:$0xff]
    %v158 = vld [vmem:[#allocation5 + $0x310] sm:$0xff]
    %v159 = vld [vmem:[#allocation5 + $0x318] sm:$0xff]
    %v160 = vld [vmem:[#allocation5 + $0x320] sm:$0xff]
    %v161 = vld [vmem:[#allocation5 + $0x328] sm:$0xff]
    %v162 = vld [vmem:[#allocation5 + $0x330] sm:$0xff]
    %v163 = vld [vmem:[#allocation5 + $0x338] sm:$0xff]
    %v164 = vld [vmem:[#allocation5 + $0x340] sm:$0xff]
    %v165 = vld [vmem:[#allocation5 + $0x348] sm:$0xff]
    %v166 = vld [vmem:[#allocation5 + $0x350] sm:$0xff]
    %v167 = vld [vmem:[#allocation5 + $0x358] sm:$0xff]
    %v168 = vld [vmem:[#allocation5 + $0x360] sm:$0xff]
    %v169 = vld [vmem:[#allocation5 + $0x368] sm:$0xff]
    %v170 = vld [vmem:[#allocation5 + $0x370] sm:$0xff]
    %v171 = vld [vmem:[#allocation5 + $0x378] sm:$0xff]
    %v172 = vld [vmem:[#allocation5 + $0x380] sm:$0xff]
    %v173 = vld [vmem:[#allocation5 + $0x388] sm:$0xff]
    %v174 = vld [vmem:[#allocation5 + $0x390] sm:$0xff]
    %v175 = vld [vmem:[#allocation5 + $0x398] sm:$0xff]
    %v176 = vld [vmem:[#allocation5 + $0x3a0] sm:$0xff]
    %v177 = vld [vmem:[#allocation5 + $0x3a8] sm:$0xff]
    %v178 = vld [vmem:[#allocation5 + $0x3b0] sm:$0xff]
    %v179 = vld [vmem:[#allocation5 + $0x3b8] sm:$0xff]
    %v180 = vld [vmem:[#allocation5 + $0x3c0] sm:$0xff]
    %v181 = vld [vmem:[#allocation5 + $0x3c8] sm:$0xff]
    %v182 = vld [vmem:[#allocation5 + $0x3d0] sm:$0xff]
    %v183 = vld [vmem:[#allocation5 + $0x3d8] sm:$0xff]
    %v184 = vld [vmem:[#allocation5 + $0x3e0] sm:$0xff]
    %v185 = vld [vmem:[#allocation5 + $0x3e8] sm:$0xff]
    %v186 = vld [vmem:[#allocation5 + $0x3f0] sm:$0xff]
    %v187 = vld [vmem:[#allocation5 + $0x3f8] sm:$0xff]
    %v188 = vld [vmem:[%s2] sm:$0x1]
    %v190 = vperm.slane %v188, 0
    %196 = vst [vmem:[#allocation1] ss:$2 sm:$0xff] %v52
    %s197 = scalar_lea.vmem [#allocation1], 16
    %198 = vst [vmem:[%s197] ss:$2 sm:$0xff] %v53
    %s199 = scalar_lea.vmem [#allocation1], 32
    %200 = vst [vmem:[%s199] ss:$2 sm:$0xff] %v54
    %s201 = scalar_lea.vmem [#allocation1], 48
    %202 = vst [vmem:[%s201] ss:$2 sm:$0xff] %v55
    %v203 = vld.sshfl [vmem:[#allocation1] sm:$0xff pattern:$0x75316420]
    %v204 = vld.sshfl [vmem:[#allocation1 + $0x8] sm:$0xff pattern:$0x75316420]
    %v205 = vld.sshfl [vmem:[#allocation1 + $0x10] sm:$0xff pattern:$0x75316420]
    %v206 = vld.sshfl [vmem:[#allocation1 + $0x18] sm:$0xff pattern:$0x75316420]
    %v207 = vld.sshfl [vmem:[#allocation1 + $0x20] sm:$0xff pattern:$0x75316420]
    %v208 = vld.sshfl [vmem:[#allocation1 + $0x28] sm:$0xff pattern:$0x75316420]
    %v209 = vld.sshfl [vmem:[#allocation1 + $0x30] sm:$0xff pattern:$0x75316420]
    %v210 = vld.sshfl [vmem:[#allocation1 + $0x38] sm:$0xff pattern:$0x75316420]
    %219 = vmatpush.msra.mxu0 %v75
    %220 = vmatpush.msra.mxu0 %v74
    %221 = vmatpush.msra.mxu0 %v73
    %222 = vmatpush.msra.mxu0 %v72
    %223 = vmatpush.msra.mxu0 %v71
    %224 = vmatpush.msra.mxu0 %v70
    %225 = vmatpush.msra.mxu0 %v69
    %226 = vmatpush.msra.mxu0 %v68
    %227 = vmatpush.msra.mxu0 %v67
    %228 = vmatpush.msra.mxu0 %v66
    %229 = vmatpush.msra.mxu0 %v65
    %230 = vmatpush.msra.mxu0 %v64
    %231 = vmatpush.msra.mxu0 %v63
    %232 = vmatpush.msra.mxu0 %v62
    %233 = vmatpush.msra.mxu0 %v61
    %234 = vmatpush.msra.mxu0 %v60
    %235 = vmatmul.f32.gmra.mxu0 %v203
    %v236 = vpop.f32.mrf.mxu0
    %v237 = vadd.f32 %v190, %v236
    %238 = vdwg.mxu0
    %239 = vmatpush.msra.mxu0 %v91
    %240 = vmatpush.msra.mxu0 %v90
    %241 = vmatpush.msra.mxu0 %v89
    %242 = vmatpush.msra.mxu0 %v88
    %243 = vmatpush.msra.mxu0 %v87
    %244 = vmatpush.msra.mxu0 %v86
    %245 = vmatpush.msra.mxu0 %v85
    %246 = vmatpush.msra.mxu0 %v84
    %247 = vmatpush.msra.mxu0 %v83
    %248 = vmatpush.msra.mxu0 %v82
    %249 = vmatpush.msra.mxu0 %v81
    %250 = vmatpush.msra.mxu0 %v80
    %251 = vmatpush.msra.mxu0 %v79
    %252 = vmatpush.msra.mxu0 %v78
    %253 = vmatpush.msra.mxu0 %v77
    %254 = vmatpush.msra.mxu0 %v76
    %255 = vmatmul.f32.gmra.mxu0 %v204
    %v256 = vpop.f32.mrf.mxu0
    %v257 = vadd.f32 %v237, %v256
    %258 = vdwg.mxu0
    %259 = vmatpush.msra.mxu0 %v107
    %260 = vmatpush.msra.mxu0 %v106
    %261 = vmatpush.msra.mxu0 %v105
    %262 = vmatpush.msra.mxu0 %v104
    %263 = vmatpush.msra.mxu0 %v103
    %264 = vmatpush.msra.mxu0 %v102
    %265 = vmatpush.msra.mxu0 %v101
    %266 = vmatpush.msra.mxu0 %v100
    %267 = vmatpush.msra.mxu0 %v99
    %268 = vmatpush.msra.mxu0 %v98
    %269 = vmatpush.msra.mxu0 %v97
    %270 = vmatpush.msra.mxu0 %v96
    %271 = vmatpush.msra.mxu0 %v95
    %272 = vmatpush.msra.mxu0 %v94
    %273 = vmatpush.msra.mxu0 %v93
    %274 = vmatpush.msra.mxu0 %v92
    %275 = vmatmul.f32.gmra.mxu0 %v205
    %v276 = vpop.f32.mrf.mxu0
    %v277 = vadd.f32 %v257, %v276
    %278 = vdwg.mxu0
    %279 = vmatpush.msra.mxu0 %v123
    %280 = vmatpush.msra.mxu0 %v122
    %281 = vmatpush.msra.mxu0 %v121
    %282 = vmatpush.msra.mxu0 %v120
    %283 = vmatpush.msra.mxu0 %v119
    %284 = vmatpush.msra.mxu0 %v118
    %285 = vmatpush.msra.mxu0 %v117
    %286 = vmatpush.msra.mxu0 %v116
    %287 = vmatpush.msra.mxu0 %v115
    %288 = vmatpush.msra.mxu0 %v114
    %289 = vmatpush.msra.mxu0 %v113
    %290 = vmatpush.msra.mxu0 %v112
    %291 = vmatpush.msra.mxu0 %v111
    %292 = vmatpush.msra.mxu0 %v110
    %293 = vmatpush.msra.mxu0 %v109
    %294 = vmatpush.msra.mxu0 %v108
    %295 = vmatmul.f32.gmra.mxu0 %v206
    %v296 = vpop.f32.mrf.mxu0
    %v297 = vadd.f32 %v277, %v296
    %298 = vdwg.mxu0
    %299 = vmatpush.msra.mxu0 %v139
    %300 = vmatpush.msra.mxu0 %v138
    %301 = vmatpush.msra.mxu0 %v137
    %302 = vmatpush.msra.mxu0 %v136
    %303 = vmatpush.msra.mxu0 %v135
    %304 = vmatpush.msra.mxu0 %v134
    %305 = vmatpush.msra.mxu0 %v133
    %306 = vmatpush.msra.mxu0 %v132
    %307 = vmatpush.msra.mxu0 %v131
    %308 = vmatpush.msra.mxu0 %v130
    %309 = vmatpush.msra.mxu0 %v129
    %310 = vmatpush.msra.mxu0 %v128
    %311 = vmatpush.msra.mxu0 %v127
    %312 = vmatpush.msra.mxu0 %v126
    %313 = vmatpush.msra.mxu0 %v125
    %314 = vmatpush.msra.mxu0 %v124
    %315 = vmatmul.f32.gmra.mxu0 %v207
    %v316 = vpop.f32.mrf.mxu0
    %v317 = vadd.f32 %v297, %v316
    %318 = vdwg.mxu0
    %319 = vmatpush.msra.mxu0 %v155
    %320 = vmatpush.msra.mxu0 %v154
    %321 = vmatpush.msra.mxu0 %v153
    %322 = vmatpush.msra.mxu0 %v152
    %323 = vmatpush.msra.mxu0 %v151
    %324 = vmatpush.msra.mxu0 %v150
    %325 = vmatpush.msra.mxu0 %v149
    %326 = vmatpush.msra.mxu0 %v148
    %327 = vmatpush.msra.mxu0 %v147
    %328 = vmatpush.msra.mxu0 %v146
    %329 = vmatpush.msra.mxu0 %v145
    %330 = vmatpush.msra.mxu0 %v144
    %331 = vmatpush.msra.mxu0 %v143
    %332 = vmatpush.msra.mxu0 %v142
    %333 = vmatpush.msra.mxu0 %v141
    %334 = vmatpush.msra.mxu0 %v140
    %335 = vmatmul.f32.gmra.mxu0 %v208
    %v336 = vpop.f32.mrf.mxu0
    %v337 = vadd.f32 %v317, %v336
    %338 = vdwg.mxu0
    %339 = vmatpush.msra.mxu0 %v171
    %340 = vmatpush.msra.mxu0 %v170
    %341 = vmatpush.msra.mxu0 %v169
    %342 = vmatpush.msra.mxu0 %v168
    %343 = vmatpush.msra.mxu0 %v167
    %344 = vmatpush.msra.mxu0 %v166
    %345 = vmatpush.msra.mxu0 %v165
    %346 = vmatpush.msra.mxu0 %v164
    %347 = vmatpush.msra.mxu0 %v163
    %348 = vmatpush.msra.mxu0 %v162
    %349 = vmatpush.msra.mxu0 %v161
    %350 = vmatpush.msra.mxu0 %v160
    %351 = vmatpush.msra.mxu0 %v159
    %352 = vmatpush.msra.mxu0 %v158
    %353 = vmatpush.msra.mxu0 %v157
    %354 = vmatpush.msra.mxu0 %v156
    %355 = vmatmul.f32.gmra.mxu0 %v209
    %v356 = vpop.f32.mrf.mxu0
    %v357 = vadd.f32 %v337, %v356
    %358 = vdwg.mxu0
    %359 = vmatpush.msra.mxu0 %v187
    %360 = vmatpush.msra.mxu0 %v186
    %361 = vmatpush.msra.mxu0 %v185
    %362 = vmatpush.msra.mxu0 %v184
    %363 = vmatpush.msra.mxu0 %v183
    %364 = vmatpush.msra.mxu0 %v182
    %365 = vmatpush.msra.mxu0 %v181
    %366 = vmatpush.msra.mxu0 %v180
    %367 = vmatpush.msra.mxu0 %v179
    %368 = vmatpush.msra.mxu0 %v178
    %369 = vmatpush.msra.mxu0 %v177
    %370 = vmatpush.msra.mxu0 %v176
    %371 = vmatpush.msra.mxu0 %v175
    %372 = vmatpush.msra.mxu0 %v174
    %373 = vmatpush.msra.mxu0 %v173
    %374 = vmatpush.msra.mxu0 %v172
    %375 = vmatmul.f32.gmra.mxu0 %v210
    %v376 = vpop.f32.mrf.mxu0
    %v377 = vadd.f32 %v357, %v376
    %378 = vdwg.mxu0
    %379 = vst [vmem:[#allocation8] sm:$0xf] %v377
    // Predicated region
    $region22: #{tpu_custom_call.1} parent=1 // pred_check
      _
    $region23: #{tpu_custom_call.1} parent=1 // pred_check_branch
      %381 = sbr.rel (0) target = $region25
    $region24: #{tpu_custom_call.1} parent=1 // pred_region
      %383 = vsyncadd [#allocation4], 0
      %s385 = sshll.u32 [#allocation7], 4
      %s386 = int_to_ptr.vmem [resolvable:$true] %s385
      %s387 = sshll.u32 %s3, 4
      %s388 = int_to_ptr.hbm [resolvable:$true] %s387
      %390 = dma.vmem_to_hbm [thread:$0]  %s386, 512, %s388, [#allocation4]
    $region25: #{tpu_custom_call.1} parent=1 // pred_fallthru
      _
    // Predicated region
    $region26: #{tpu_custom_call.1} parent=1 // pred_check
      _
    $region27: #{tpu_custom_call.1} parent=1 // pred_check_branch
      %392 = sbr.rel (0) target = $region29
    $region28: #{tpu_custom_call.1} parent=1 // pred_region
      %394 = vsyncadd [#allocation9], 0
      %s396 = sshll.u32 [#allocation8], 4
      %s397 = int_to_ptr.vmem [resolvable:$true] %s396
      %s398 = sshll.u32 %s4, 4
      %s399 = int_to_ptr.hbm [resolvable:$true] %s398
      %401 = dma.vmem_to_hbm [thread:$0]  %s397, 64, %s399, [#allocation9]
    $region29: #{tpu_custom_call.1} parent=1 // pred_fallthru
      _
    // Predicated region
    $region30: #{tpu_custom_call.1} parent=1 // pred_check
      _
    $region31: #{tpu_custom_call.1} parent=1 // pred_check_branch
      %403 = sbr.rel (0) target = $region33
    $region32: #{tpu_custom_call.1} parent=1 // pred_region
      %405 = dma.done [#allocation4], 512
    $region33: #{tpu_custom_call.1} parent=1 // pred_fallthru
      _
    // Predicated region
    $region34: #{tpu_custom_call.1} parent=1 // pred_check
      _
    $region35: #{tpu_custom_call.1} parent=1 // pred_check_branch
      %407 = sbr.rel (0) target = $region37
    $region36: #{tpu_custom_call.1} parent=1 // pred_region
      %409 = dma.done [#allocation9], 64
    $region37: #{tpu_custom_call.1} parent=1 // pred_fallthru
      _
    %410 = vsyncpa [#allocation3], 1
    %411 = vsyncpa [#allocation6], 1
    %412 = vsyncpa [#allocation4], 1
    %413 = vsyncpa [#allocation9], 1

</llo_original>
